<compile_context>
chip_gen: v7x
topology: tpu7x:2x2x1
jax: 0.10.0
libtpu: 0.0.40
codegen_flags: <defaults>
</compile_context>

<pallas_src>
import jax
import jax.numpy as jnp
from jax.experimental import pallas as pl
from jax.experimental.pallas import tpu as pltpu


def _conv1x1_kernel(x_ref, w_ref, b_ref, o_ref):
    # x_ref: (TB, C_in, T_HW)   VMEM
    # w_ref: (C_out, C_in)      VMEM
    # b_ref: (C_out, 1)         VMEM
    # o_ref: (TB, C_out, T_HW)  VMEM
    tb = x_ref.shape[0]

    # Hoisted once per grid step (TB is a static trace-time constant).
    w = w_ref[...]
    bias_col = b_ref[...].astype(jnp.float32)          # (C_out, 1), lane-broadcasts

    # One (C_out, C_in) x (C_in, T_HW) MXU matmul per batch element in the tile.
    for n in range(tb):
        acc = jnp.dot(w, x_ref[n], preferred_element_type=jnp.float32)  # (C_out, T_HW)
        o_ref[n] = (acc + bias_col).astype(o_ref.dtype)


def _auto_hw_tile(hw, c_in, batch_tile, budget_bytes=2 * 1024 * 1024):
    """Largest 128-multiple divisor of hw keeping one x block under budget_bytes."""
    if hw % 128 != 0:
        return hw                                   # full extent (satisfies block rule)
    t = hw
    while batch_tile * c_in * t * 4 > budget_bytes and t % 256 == 0:
        t //= 2
    return t


def box_regression_net680_forward(x_nchw, weight, bias, *, batch_tile=None, hw_tile=None):
    """Forward pass of BoxRegressionNet680 (1x1 conv + view(N, C_out, H*W)).

    Args:
      x_nchw: (N, C_in, H, W) float32, NCHW like PyTorch.
      weight: (C_out, C_in, 1, 1) float32 (PyTorch Conv2d weight layout).
      bias:   (C_out,) float32.
      batch_tile: optional batch-axis tile (default: whole batch, one step).
      hw_tile: optional H*W-axis tile (must divide H*W and be a multiple of
        128, or equal H*W).  Default: auto — full H*W at small sizes, halved
        until one x block fits a ~2 MiB VMEM budget at large sizes.

    Returns:
      dict with 'out': (N, C_out, H*W) matching the PyTorch module.
    """
    N, C_in, H, W = x_nchw.shape
    C_out = weight.shape[0]
    HW = H * W

    # Free reshapes only — no transposes, no padding, no extra HBM passes.
    x3 = x_nchw.reshape(N, C_in, HW)        # (N, C_in, H*W), contiguous view
    w_mat = weight.reshape(C_out, C_in)     # (C_out, C_in)
    b_col = bias.reshape(C_out, 1)          # (C_out, 1)

    if batch_tile is None or batch_tile <= 0 or batch_tile > N or (N % batch_tile) != 0:
        batch_tile = N
    if (hw_tile is None or hw_tile <= 0 or (HW % hw_tile) != 0
            or (hw_tile != HW and hw_tile % 128 != 0)):
        hw_tile = _auto_hw_tile(HW, C_in, batch_tile)

    grid = (N // batch_tile, HW // hw_tile)

    out = pl.pallas_call(
        _conv1x1_kernel,
        out_shape=jax.ShapeDtypeStruct((N, C_out, HW), x_nchw.dtype),
        grid=grid,
        in_specs=[
            # x: one (batch, H*W) tile per step.  Last two block dims are
            # either the full extents or multiples of (8, 128) by construction.
            pl.BlockSpec((batch_tile, C_in, hw_tile), lambda i, j: (i, 0, j)),
            # Full weight matrix resident every step (tiny).
            pl.BlockSpec((C_out, C_in), lambda i, j: (0, 0)),
            # Bias column resident every step (tiny).
            pl.BlockSpec((C_out, 1), lambda i, j: (0, 0)),
        ],
        out_specs=pl.BlockSpec((batch_tile, C_out, hw_tile), lambda i, j: (i, 0, j)),
        compiler_params=pltpu.CompilerParams(
            dimension_semantics=("parallel", "parallel"),  # independent tiles
        ),
    )(x3, w_mat, b_col)

    # TODO(synk): if this head ever lives inside a bf16 model, feed x3/w_mat as
    # bfloat16 (keeping preferred_element_type=jnp.float32) to halve HBM traffic.
    return {"out": out}


if __name__ == "__main__":
    # Shapes consistent with the module's forward:
    #   batch=2, input_channels=32, spatial 16x16, out channels = cfg[2] = 3.
    N, C_in, H, W = 2, 32, 16, 16
    C_out = 3  # box_regression_cfg[0][2]

    key = jax.random.PRNGKey(0)
    kx, kw, kb = jax.random.split(key, 3)

    x = jax.random.normal(kx, (N, C_in, H, W), dtype=jnp.float32)
    # Deterministic synthetic Conv2d parameters (PyTorch layout (C_out, C_in, 1, 1)).
    weight = jax.random.normal(kw, (C_out, C_in, 1, 1), dtype=jnp.float32) * 0.05
    bias = jax.random.normal(kb, (C_out,), dtype=jnp.float32) * 0.01

    result = box_regression_net680_forward(x, weight, bias)
    out = jax.block_until_ready(result["out"])

    # Pure-JAX reference of the same 1x1-conv forward (correctness check).
    ref = jnp.einsum("nchw,oc->nohw", x, weight.reshape(C_out, C_in)) + bias[None, :, None, None]
    ref = ref.reshape(N, C_out, H * W)
    assert out.shape == (N, C_out, H * W)
    assert jnp.allclose(out, ref, atol=1e-4, rtol=1e-4)

    print("KERNEL_OK")
</pallas_src>

<mosaic_0001>
module attributes {stable_mosaic.version = 11 : i64} {
  func.func @_conv1x1_kernel(%arg0: i32, %arg1: i32, %arg2: memref<2x32x256xf32, #tpu.memory_space<vmem>>, %arg3: memref<3x32xf32, #tpu.memory_space<vmem>>, %arg4: memref<3x1xf32, #tpu.memory_space<vmem>>, %arg5: memref<2x3x256xf32, #tpu.memory_space<vmem>>) attributes {dimension_semantics = [#tpu.dimension_semantics<parallel>, #tpu.dimension_semantics<parallel>], iteration_bounds = array<i64: 1, 1>, scalar_prefetch = 0 : i64, scratch_operands = 0 : i64, tpu.core_type = #tpu.core_type<tc>, window_params = [{transform_indices = @transform_0, window_bounds = array<i64: 2, 32, 256>}, {pipeline_mode = #tpu.pipeline_mode<synchronous>, transform_indices = @transform_1, window_bounds = array<i64: 3, 32>}, {pipeline_mode = #tpu.pipeline_mode<synchronous>, transform_indices = @transform_2, window_bounds = array<i64: 3, 1>}, {transform_indices = @transform_3, window_bounds = array<i64: 2, 3, 256>}]} {
    %c0 = arith.constant 0 : index
    %c0_0 = arith.constant 0 : index
    %0 = vector.load %arg3[%c0, %c0_0] : memref<3x32xf32, #tpu.memory_space<vmem>>, vector<3x32xf32>
    %c0_1 = arith.constant 0 : index
    %c0_2 = arith.constant 0 : index
    %1 = vector.load %arg4[%c0_1, %c0_2] : memref<3x1xf32, #tpu.memory_space<vmem>>, vector<3x1xf32>
    %c0_3 = arith.constant 0 : index
    %c0_4 = arith.constant 0 : index
    %c0_5 = arith.constant 0 : index
    %2 = vector.load %arg2[%c0_3, %c0_4, %c0_5] : memref<2x32x256xf32, #tpu.memory_space<vmem>>, vector<1x32x256xf32>
    %3 = vector.shape_cast %2 : vector<1x32x256xf32> to vector<32x256xf32>
    %cst = arith.constant dense<0.000000e+00> : vector<3x256xf32>
    %4 = tpu.matmul %0, %3, %cst {dimension_numbers = #tpu.dot_dimension_numbers<[1], [0], [0], [1], [0, 0, 1, 1], [], []>} : vector<3x32xf32>, vector<32x256xf32>, vector<3x256xf32> -> vector<3x256xf32>
    %5 = vector.broadcast %1 : vector<3x1xf32> to vector<3x256xf32>
    %6 = arith.addf %4, %5 : vector<3x256xf32>
    %c0_6 = arith.constant 0 : index
    %c0_7 = arith.constant 0 : index
    %c0_8 = arith.constant 0 : index
    %7 = vector.load %arg5[%c0_6, %c0_7, %c0_8] : memref<2x3x256xf32, #tpu.memory_space<vmem>>, vector<1x3x256xf32>
    %8 = vector.shape_cast %7 : vector<1x3x256xf32> to vector<3x256xf32>
    %9 = vector.shape_cast %6 : vector<3x256xf32> to vector<1x3x256xf32>
    tpu.vector_store %arg5[%c0_6, %c0_7, %c0_8], %9 {strides = array<i32>} : memref<2x3x256xf32, #tpu.memory_space<vmem>>, vector<1x3x256xf32>,
    %c1 = arith.constant 1 : index
    %c0_9 = arith.constant 0 : index
    %c0_10 = arith.constant 0 : index
    %10 = vector.load %arg2[%c1, %c0_9, %c0_10] : memref<2x32x256xf32, #tpu.memory_space<vmem>>, vector<1x32x256xf32>
    %11 = vector.shape_cast %10 : vector<1x32x256xf32> to vector<32x256xf32>
    %cst_11 = arith.constant dense<0.000000e+00> : vector<3x256xf32>
    %12 = tpu.matmul %0, %11, %cst_11 {dimension_numbers = #tpu.dot_dimension_numbers<[1], [0], [0], [1], [0, 0, 1, 1], [], []>} : vector<3x32xf32>, vector<32x256xf32>, vector<3x256xf32> -> vector<3x256xf32>
    %13 = vector.broadcast %1 : vector<3x1xf32> to vector<3x256xf32>
    %14 = arith.addf %12, %13 : vector<3x256xf32>
    %c1_12 = arith.constant 1 : index
    %c0_13 = arith.constant 0 : index
    %c0_14 = arith.constant 0 : index
    %15 = vector.load %arg5[%c1_12, %c0_13, %c0_14] : memref<2x3x256xf32, #tpu.memory_space<vmem>>, vector<1x3x256xf32>
    %16 = vector.shape_cast %15 : vector<1x3x256xf32> to vector<3x256xf32>
    %17 = vector.shape_cast %14 : vector<3x256xf32> to vector<1x3x256xf32>
    tpu.vector_store %arg5[%c1_12, %c0_13, %c0_14], %17 {strides = array<i32>} : memref<2x3x256xf32, #tpu.memory_space<vmem>>, vector<1x3x256xf32>,
    return
  }
  func.func @transform_0(%arg0: i32, %arg1: i32) -> (i32, i32, i32) {
    %c0_i32 = arith.constant 0 : i32
    %c0_i32_0 = arith.constant 0 : i32
    return %arg0, %c0_i32, %arg1 : i32, i32, i32
  }
  func.func @transform_1(%arg0: i32, %arg1: i32) -> (i32, i32) {
    %c0_i32 = arith.constant 0 : i32
    %c0_i32_0 = arith.constant 0 : i32
    %c0_i32_1 = arith.constant 0 : i32
    return %c0_i32, %c0_i32_0 : i32, i32
  }
  func.func @transform_2(%arg0: i32, %arg1: i32) -> (i32, i32) {
    %c0_i32 = arith.constant 0 : i32
    %c0_i32_0 = arith.constant 0 : i32
    %c0_i32_1 = arith.constant 0 : i32
    return %c0_i32, %c0_i32_0 : i32, i32
  }
  func.func @transform_3(%arg0: i32, %arg1: i32) -> (i32, i32, i32) {
    %c0_i32 = arith.constant 0 : i32
    %c0_i32_0 = arith.constant 0 : i32
    return %arg0, %c0_i32, %arg1 : i32, i32, i32
  }
}

</mosaic_0001>

<llo_original>
// kernel: tpu_custom_call.1
$region0: #{tpu_custom_call.1}
  #allocation0 [shape = 'u32[]', space=smem, size = 0x4, offset = 0x4, fixed_abs, tag = 'smem constant byte address 0x4 - core index']
  #allocation1 [shape = 'u32[144,128]{1,0:T(1,128)}', space=vmem, size = 0x12000, scoped, tag = 'internal scratch']
  %s0 = inlined_call_operand.hbm [shape: f32[2,32,256], index: 0, kind: input, shape index: {}]
  %s1 = inlined_call_operand.vmem [shape: f32[3,32], index: 1, kind: input, shape index: {}]
  %s2 = inlined_call_operand.vmem [shape: f32[3,1], index: 2, kind: input, shape index: {}]
  %s3 = inlined_call_operand.vmem [shape: f32[2,3,256], index: 3, kind: output, shape index: {}]
  %s4 = sld [smem:[#allocation0]]
  $region26: #{tpu_custom_call.1} parent=0
    _
  %s6 = ssub.s32 1, %s4
  %s7 = scalar_select 0, %s6, %s4
  $region1: #{tpu_custom_call.1} parent=0
    #allocation2 [shape = 'u8[65536]{0}', space=vmem, size = 0x10000, scoped, tag = 'input window, operand 0, single buffered']
    #allocation3 [shape = 's32[1]{0}', space=sflag, size = 0x4, scoped, tag = 'scoped memory for tpu_custom_call.1']
    %8 = vsyncpa [#allocation3], 0
    // Predicated region
    $region2: #{tpu_custom_call.1} parent=1 // pred_check
      _
    $region3: #{tpu_custom_call.1} parent=1 // pred_check_branch
      %10 = sbr.rel (0) target = $region5
    $region4: #{tpu_custom_call.1} parent=1 // pred_region
      %s12 = ssub.s32 2048, 2048
      %13 = vsyncadd [#allocation3], %s12
      %s14 = sshll.u32 [#allocation2], 4
      %s15 = int_to_ptr.vmem [resolvable:$true] %s14
      %20 = dma.hbm_to_vmem [thread:$0]  %s0, 2048, %s15, [#allocation3], 256, 256, 16
    $region5: #{tpu_custom_call.1} parent=1 // pred_fallthru
      _
    // Predicated region
    $region6: #{tpu_custom_call.1} parent=1 // pred_check
      _
    $region7: #{tpu_custom_call.1} parent=1 // pred_check_branch
      %22 = sbr.rel (0) target = $region9
    $region8: #{tpu_custom_call.1} parent=1 // pred_region
      _
    $region9: #{tpu_custom_call.1} parent=1 // pred_fallthru
      _
    // Predicated region
    $region10: #{tpu_custom_call.1} parent=1 // pred_check
      _
    $region11: #{tpu_custom_call.1} parent=1 // pred_check_branch
      %24 = sbr.rel (0) target = $region13
    $region12: #{tpu_custom_call.1} parent=1 // pred_region
      _
    $region13: #{tpu_custom_call.1} parent=1 // pred_fallthru
      _
    // Predicated region
    $region14: #{tpu_custom_call.1} parent=1 // pred_check
      _
    $region15: #{tpu_custom_call.1} parent=1 // pred_check_branch
      %26 = sbr.rel (0) target = $region17
    $region16: #{tpu_custom_call.1} parent=1 // pred_region
      %27 = dma.done [#allocation3], 2048
    $region17: #{tpu_custom_call.1} parent=1 // pred_fallthru
      _
    %v28 = vld [vmem:[%s1] sm:$0x7]
    %v29 = vld [vmem:[%s2] sm:$0x7]
    %v30 = vld [vmem:[#allocation2] sm:$0xff]
    %v31 = vld [vmem:[#allocation2 + $0x8] sm:$0xff]
    %v32 = vld [vmem:[#allocation2 + $0x10] sm:$0xff]
    %v33 = vld [vmem:[#allocation2 + $0x18] sm:$0xff]
    %v34 = vld [vmem:[#allocation2 + $0x20] sm:$0xff]
    %v35 = vld [vmem:[#allocation2 + $0x28] sm:$0xff]
    %v36 = vld [vmem:[#allocation2 + $0x30] sm:$0xff]
    %v37 = vld [vmem:[#allocation2 + $0x38] sm:$0xff]
    %39 = vset.pattern.permute.xlu0 0
    %40 = vperm.xlu0 %39, %v29
    %v41 = vpop.permute.xlu0 %40
    %vm43 = vcmask 261120
    %v45 = vsel %vm43, %v28, 0
    %47 = vmatprep.subr.mxu0 %v31
    %48 = vmatpush1.msra.mxu0 %v30
    %49 = vmatprep.subr.mxu0 %v33
    %50 = vmatpush1.msra.mxu0 %v32
    %51 = vmatprep.subr.mxu0 %v35
    %52 = vmatpush1.msra.mxu0 %v34
    %53 = vmatprep.subr.mxu0 %v37
    %54 = vmatpush1.msra.mxu0 %v36
    %55 = vmatprep.subr.mxu0 0.0
    %56 = vmatpush1.msra.mxu0 0.0
    %57 = vmatprep.subr.mxu0 0.0
    %58 = vmatpush1.msra.mxu0 0.0
    %59 = vmatprep.subr.mxu0 0.0
    %60 = vmatpush1.msra.mxu0 0.0
    %61 = vmatprep.subr.mxu0 0.0
    %62 = vmatpush1.msra.mxu0 0.0
    %63 = vmatprep.subr.mxu0 0.0
    %64 = vmatpush1.msra.mxu0 0.0
    %65 = vmatprep.subr.mxu0 0.0
    %66 = vmatpush1.msra.mxu0 0.0
    %67 = vmatprep.subr.mxu0 0.0
    %68 = vmatpush1.msra.mxu0 0.0
    %69 = vmatprep.subr.mxu0 0.0
    %70 = vmatpush1.msra.mxu0 0.0
    %71 = vmatprep.subr.mxu0 0.0
    %72 = vmatpush1.msra.mxu0 0.0
    %73 = vmatprep.subr.mxu0 0.0
    %74 = vmatpush1.msra.mxu0 0.0
    %75 = vmatprep.subr.mxu0 0.0
    %76 = vmatpush1.msra.mxu0 0.0
    %77 = vmatprep.subr.mxu0 0.0
    %78 = vmatpush1.msra.mxu0 0.0
    %79 = vmatprep.subr.mxu0 0.0
    %80 = vmatpush1.msra.mxu0 0.0
    %81 = vmatprep.subr.mxu0 0.0
    %82 = vmatpush1.msra.mxu0 0.0
    %83 = vmatprep.subr.mxu0 0.0
    %84 = vmatpush1.msra.mxu0 0.0
    %85 = vmatprep.subr.mxu0 0.0
    %86 = vmatpush1.msra.mxu0 0.0
    %87 = vmatprep.subr.mxu0 0.0
    %88 = vmatpush1.msra.mxu0 0.0
    %89 = vmatprep.subr.mxu0 0.0
    %90 = vmatpush1.msra.mxu0 0.0
    %91 = vmatprep.subr.mxu0 0.0
    %92 = vmatpush1.msra.mxu0 0.0
    %93 = vmatprep.subr.mxu0 0.0
    %94 = vmatpush1.msra.mxu0 0.0
    %95 = vmatprep.subr.mxu0 0.0
    %96 = vmatpush1.msra.mxu0 0.0
    %97 = vmatprep.subr.mxu0 0.0
    %98 = vmatpush1.msra.mxu0 0.0
    %99 = vmatprep.subr.mxu0 0.0
    %100 = vmatpush1.msra.mxu0 0.0
    %101 = vmatprep.subr.mxu0 0.0
    %102 = vmatpush1.msra.mxu0 0.0
    %103 = vmatprep.subr.mxu0 0.0
    %104 = vmatpush1.msra.mxu0 0.0
    %105 = vmatprep.subr.mxu0 0.0
    %106 = vmatpush1.msra.mxu0 0.0
    %107 = vmatprep.subr.mxu0 0.0
    %108 = vmatpush1.msra.mxu0 0.0
    %109 = vmatprep.subr.mxu0 0.0
    %110 = vmatpush1.msra.mxu0 0.0
    %111 = vmatprep.mubr.f32.mxu0 0.0
    %112 = vmatmul.mubr.f32.gmra.mrb[0].mxu0 %v45
    %v113 = vpop.f32.mrb[0].mxu0
    %v114 = vadd.f32 %v41, %v113
    %v115 = vpop.f32.mrb[0].mxu0
    %v116 = vadd.f32 %v41, %v115
    %117 = vdwg.mxu0
    %v120 = vcombine.low %v114, %v116
    %122 = vst [vmem:[%s3] sm:$0x77] %v120
    %s123 = scalar_lea.vmem [#allocation2], 64
    %v124 = vld [vmem:[%s123] sm:$0xff]
    %v125 = vld [vmem:[%s123 + $0x8] sm:$0xff]
    %v126 = vld [vmem:[%s123 + $0x10] sm:$0xff]
    %v127 = vld [vmem:[%s123 + $0x18] sm:$0xff]
    %v128 = vld [vmem:[%s123 + $0x20] sm:$0xff]
    %v129 = vld [vmem:[%s123 + $0x28] sm:$0xff]
    %v130 = vld [vmem:[%s123 + $0x30] sm:$0xff]
    %v131 = vld [vmem:[%s123 + $0x38] sm:$0xff]
    %132 = vmatprep.subr.mxu0 %v125
    %133 = vmatpush1.msra.mxu0 %v124
    %134 = vmatprep.subr.mxu0 %v127
    %135 = vmatpush1.msra.mxu0 %v126
    %136 = vmatprep.subr.mxu0 %v129
    %137 = vmatpush1.msra.mxu0 %v128
    %138 = vmatprep.subr.mxu0 %v131
    %139 = vmatpush1.msra.mxu0 %v130
    %140 = vmatprep.subr.mxu0 0.0
    %141 = vmatpush1.msra.mxu0 0.0
    %142 = vmatprep.subr.mxu0 0.0
    %143 = vmatpush1.msra.mxu0 0.0
    %144 = vmatprep.subr.mxu0 0.0
    %145 = vmatpush1.msra.mxu0 0.0
    %146 = vmatprep.subr.mxu0 0.0
    %147 = vmatpush1.msra.mxu0 0.0
    %148 = vmatprep.subr.mxu0 0.0
    %149 = vmatpush1.msra.mxu0 0.0
    %150 = vmatprep.subr.mxu0 0.0
    %151 = vmatpush1.msra.mxu0 0.0
    %152 = vmatprep.subr.mxu0 0.0
    %153 = vmatpush1.msra.mxu0 0.0
    %154 = vmatprep.subr.mxu0 0.0
    %155 = vmatpush1.msra.mxu0 0.0
    %156 = vmatprep.subr.mxu0 0.0
    %157 = vmatpush1.msra.mxu0 0.0
    %158 = vmatprep.subr.mxu0 0.0
    %159 = vmatpush1.msra.mxu0 0.0
    %160 = vmatprep.subr.mxu0 0.0
    %161 = vmatpush1.msra.mxu0 0.0
    %162 = vmatprep.subr.mxu0 0.0
    %163 = vmatpush1.msra.mxu0 0.0
    %164 = vmatprep.subr.mxu0 0.0
    %165 = vmatpush1.msra.mxu0 0.0
    %166 = vmatprep.subr.mxu0 0.0
    %167 = vmatpush1.msra.mxu0 0.0
    %168 = vmatprep.subr.mxu0 0.0
    %169 = vmatpush1.msra.mxu0 0.0
    %170 = vmatprep.subr.mxu0 0.0
    %171 = vmatpush1.msra.mxu0 0.0
    %172 = vmatprep.subr.mxu0 0.0
    %173 = vmatpush1.msra.mxu0 0.0
    %174 = vmatprep.subr.mxu0 0.0
    %175 = vmatpush1.msra.mxu0 0.0
    %176 = vmatprep.subr.mxu0 0.0
    %177 = vmatpush1.msra.mxu0 0.0
    %178 = vmatprep.subr.mxu0 0.0
    %179 = vmatpush1.msra.mxu0 0.0
    %180 = vmatprep.subr.mxu0 0.0
    %181 = vmatpush1.msra.mxu0 0.0
    %182 = vmatprep.subr.mxu0 0.0
    %183 = vmatpush1.msra.mxu0 0.0
    %184 = vmatprep.subr.mxu0 0.0
    %185 = vmatpush1.msra.mxu0 0.0
    %186 = vmatprep.subr.mxu0 0.0
    %187 = vmatpush1.msra.mxu0 0.0
    %188 = vmatprep.subr.mxu0 0.0
    %189 = vmatpush1.msra.mxu0 0.0
    %190 = vmatprep.subr.mxu0 0.0
    %191 = vmatpush1.msra.mxu0 0.0
    %192 = vmatprep.subr.mxu0 0.0
    %193 = vmatpush1.msra.mxu0 0.0
    %194 = vmatprep.subr.mxu0 0.0
    %195 = vmatpush1.msra.mxu0 0.0
    %196 = vmatprep.mubr.f32.mxu0 0.0
    %197 = vmatmul.mubr.f32.gmra.mrb[0].mxu0 %v45
    %v198 = vpop.f32.mrb[0].mxu0
    %v199 = vadd.f32 %v41, %v198
    %v200 = vpop.f32.mrb[0].mxu0
    %v201 = vadd.f32 %v41, %v200
    %202 = vdwg.mxu0
    %v205 = vcombine.low %v199, %v201
    %s207 = scalar_lea.vmem %s3, 8
    %208 = vst [vmem:[%s207] sm:$0x77] %v205
    // Predicated region
    $region18: #{tpu_custom_call.1} parent=1 // pred_check
      _
    $region19: #{tpu_custom_call.1} parent=1 // pred_check_branch
      %210 = sbr.rel (0) target = $region21
    $region20: #{tpu_custom_call.1} parent=1 // pred_region
      _
    $region21: #{tpu_custom_call.1} parent=1 // pred_fallthru
      _
    // Predicated region
    $region22: #{tpu_custom_call.1} parent=1 // pred_check
      _
    $region23: #{tpu_custom_call.1} parent=1 // pred_check_branch
      %212 = sbr.rel (0) target = $region25
    $region24: #{tpu_custom_call.1} parent=1 // pred_region
      _
    $region25: #{tpu_custom_call.1} parent=1 // pred_fallthru
      _
    %213 = vsyncpa [#allocation3], 1

</llo_original>
